<compile_context>
chip_gen: v7x
topology: tpu7x:2x2x1
jax: 0.10.0
libtpu: 0.0.40
codegen_flags: <defaults>
</compile_context>

<pallas_src>
import math

import jax
import jax.numpy as jnp
from jax.experimental import pallas as pl
from jax.experimental.pallas import tpu as pltpu


# --------------------------------------------------------------------------- #
# Helpers: VMEM accounting + tile selection
# --------------------------------------------------------------------------- #
def _round_up(x, m):
    return ((x + m - 1) // m) * m


def _padded_bytes(shape, dtype):
    """VMEM footprint of a 2-D-tiled block: lane dim padded to 128, sublane dim
    padded to the per-dtype sublane pack (8 for f32, 16 for bf16)."""
    itemsize = jnp.dtype(dtype).itemsize
    sublane = 8 * (4 // itemsize)
    dims = list(shape)
    dims[-1] = _round_up(dims[-1], 128)
    if len(dims) >= 2:
        dims[-2] = _round_up(dims[-2], sublane)
    total = itemsize
    for d in dims:
        total *= d
    return total


def _block_vmem_bytes(tb, tn, K, R, Hp, compute_dtype):
    """Per-grid-step VMEM: double-buffered I/O blocks + weight slab + the
    in-kernel matmul-result slab and accumulator (review: count everything)."""
    x_b = 2 * tb * _padded_bytes((tn, K), compute_dtype)           # nodes block (2x buf)
    s_b = 2 * tb * _padded_bytes((tn, R), jnp.float32)             # inv-degree block (lane-padded!)
    w_b = 2 * _padded_bytes((K, (R + 1) * Hp), compute_dtype)      # weight slab (counted 2x even if Buffered(1))
    o_b = 2 * tb * _padded_bytes((tn, Hp), jnp.float32)            # output block (2x buf)
    xw_b = tb * _padded_bytes((tn, (R + 1) * Hp), jnp.float32)     # in-kernel matmul result
    acc_b = tb * _padded_bytes((tn, Hp), jnp.float32)              # in-kernel accumulator
    return x_b + s_b + w_b + o_b + xw_b + acc_b


def _pick_row_tile(N, cap=256):
    """Largest divisor of N that is a multiple of 8 (or N itself), capped so
    large graphs keep a bounded per-block VMEM footprint and get pipelining."""
    for t in range(min(N, cap), 0, -1):
        if N % t == 0 and (t % 8 == 0 or t == N):
            return t
    return N


def _pick_batch_tile(B, n_row_steps, block_bytes_of_tb, budget_bytes):
    """Largest divisor of B whose block fits the VMEM budget; prefer choices
    that leave >= 2 total grid steps so both v7x TensorCores (megacore) run."""
    fitting = [tb for tb in range(1, B + 1)
               if B % tb == 0 and block_bytes_of_tb(tb) <= budget_bytes]
    if not fitting:
        return 1
    parallel = [tb for tb in fitting if (B // tb) * n_row_steps >= 2]
    return max(parallel) if parallel else max(fitting)


# --------------------------------------------------------------------------- #
# Kernel
# --------------------------------------------------------------------------- #
def _relation_graph_kernel(x_ref, scale_ref, w_ref, out_ref):
    # x_ref:     (tb, tn, K)        compute dtype (bf16)
    # scale_ref: (tb, tn, R)        f32, 1/degree per (node, relation)
    # w_ref:     (K, (R+1)*Hp)      compute dtype; Hp-wide column blocks are
    #                               [w_r[0]^T, ..., w_r[R-1]^T, w_0^T], zero-padded H->Hp
    # out_ref:   (tb, tn, Hp)       f32 (wrapper slices Hp back to H)
    tb, tn, k_dim = x_ref.shape
    hp = out_ref.shape[-1]
    n_rel = w_ref.shape[-1] // hp - 1

    # Leading-dim merge is layout-free: one big-M MXU contraction instead of
    # tb small (tn x K)x(K x H) matmuls.  f32 accumulation on the MXU.
    x2 = x_ref[...].reshape(tb * tn, k_dim)
    xw = jnp.dot(x2, w_ref[...], preferred_element_type=jnp.float32)  # (M, (R+1)*Hp)

    s2 = scale_ref[...].reshape(tb * tn, n_rel)                       # (M, R) f32

    # Every slice below sits at an Hp-aligned (multiple-of-128) lane offset:
    # no lane-shift relayouts.  The (M,1)->(M,Hp) broadcast of the inverse
    # degree is a cheap lane splat on otherwise-idle slots.
    acc = xw[:, n_rel * hp:(n_rel + 1) * hp]          # x @ w_0^T term (unscaled)
    for r in range(n_rel):                            # static unroll, R is small
        acc = acc + xw[:, r * hp:(r + 1) * hp] * s2[:, r:r + 1]

    out_ref[...] = acc.reshape(tb, tn, hp).astype(out_ref.dtype)


# --------------------------------------------------------------------------- #
# Wrapper
# --------------------------------------------------------------------------- #
def relation_graph_forward(nodes, adj, w_0, w_r, *,
                           compute_dtype=jnp.bfloat16,
                           vmem_block_budget_bytes=12 * 2**20):
    """RelationGraph forward (eval mode).  nodes: (B,N,K), adj: (B,R,N,N),
    w_0: (H,K), w_r: (R,H,K) -> (B,N,H) float32."""
    B, N, K = nodes.shape
    R, H, K2 = w_r.shape
    assert K2 == K
    assert adj.shape == (B, R, N, N)
    assert w_0.shape == (H, K)

    # Pad hidden dim to a lane-dense multiple of 128 (unmasked stores; all
    # per-relation slices of the fused matmul output become 128-aligned).
    Hp = _round_up(H, 128)

    # ---- wrapper-side precompute (cheap XLA ops) -----------------------------
    # The (B,R,N,N) adjacency never enters the kernel: only 1/degree is needed.
    c = jnp.sum(adj, axis=-1)                                     # (B, R, N)
    inv_c = jnp.where(c == 0.0, 1.0, 1.0 / c)
    # Compact per-(node, relation) scale in f32: only R real lanes of HBM
    # traffic; the 128-lane VMEM pad is a few KB per block (counted above).
    scale = jnp.transpose(inv_c, (0, 2, 1)).astype(jnp.float32)   # (B, N, R)

    # Fused, pre-transposed weight slab (K, (R+1)*Hp).
    w_stack = jnp.concatenate([w_r, w_0[None]], axis=0)           # (R+1, H, K)
    w_t = jnp.transpose(w_stack, (0, 2, 1))                       # (R+1, K, H)
    if Hp != H:
        w_t = jnp.pad(w_t, ((0, 0), (0, 0), (0, Hp - H)))         # (R+1, K, Hp)
    w_all = (jnp.transpose(w_t, (1, 0, 2))
             .reshape(K, (R + 1) * Hp)
             .astype(compute_dtype))

    # bf16 operands at the call boundary; accumulation stays f32 in-kernel.
    nodes_c = nodes.astype(compute_dtype)

    # ---- tiling --------------------------------------------------------------
    tn = _pick_row_tile(N)
    n_row_steps = N // tn
    blk_of = lambda tb: _block_vmem_bytes(tb, tn, K, R, Hp, compute_dtype)
    tb = _pick_batch_tile(B, n_row_steps, blk_of, vmem_block_budget_bytes)
    grid = (B // tb, n_row_steps)

    blk_bytes = blk_of(tb)
    # Scoped-VMEM limit matched to the chosen tiling (headroom, capped so it
    # stays within v7x's 64 MiB physical VMEM).
    vmem_limit = int(min(48 * 2**20, max(16 * 2**20, 2 * blk_bytes)))

    itemsize = jnp.dtype(compute_dtype).itemsize
    cost = pl.CostEstimate(
        flops=2 * B * N * K * (R + 1) * Hp,
        transcendentals=0,
        bytes_accessed=(B * N * K * itemsize + B * N * R * 4
                        + K * (R + 1) * Hp * itemsize + B * N * Hp * 4),
    )

    x_spec = pl.BlockSpec((tb, tn, K), lambda b, n: (b, n, 0))
    s_spec = pl.BlockSpec((tb, tn, R), lambda b, n: (b, n, 0))
    out_spec = pl.BlockSpec((tb, tn, Hp), lambda b, n: (b, n, 0))

    def run(single_buffer_weights):
        # Weight slab has a constant index_map -> fetched once; request a
        # single buffer to halve its VMEM footprint.  Fall back to default
        # double buffering if this JAX version rejects buffer_count=1.
        if single_buffer_weights:
            w_spec = pl.BlockSpec((K, (R + 1) * Hp), lambda b, n: (0, 0),
                                  pipeline_mode=pl.Buffered(1))
        else:
            w_spec = pl.BlockSpec((K, (R + 1) * Hp), lambda b, n: (0, 0))
        return pl.pallas_call(
            _relation_graph_kernel,
            out_shape=jax.ShapeDtypeStruct((B, N, Hp), jnp.float32),
            grid_spec=pltpu.PrefetchScalarGridSpec(
                num_scalar_prefetch=0,
                grid=grid,
                in_specs=[x_spec, s_spec, w_spec],
                out_specs=out_spec,
            ),
            compiler_params=pltpu.CompilerParams(
                dimension_semantics=("parallel", "parallel"),
                vmem_limit_bytes=vmem_limit,
            ),
            cost_estimate=cost,
        )(nodes_c, scale, w_all)

    try:
        out_padded = run(True)
    except Exception:  # pl.Buffered(1) unsupported here -> default buffering
        out_padded = run(False)

    return out_padded[..., :H] if Hp != H else out_padded


# --------------------------------------------------------------------------- #
# Reference + self-test
# --------------------------------------------------------------------------- #
def _reference_forward(nodes, adj, w_0, w_r):
    xw_0 = jnp.einsum("ijk,lk->ijl", nodes, w_0)
    xw_r = jnp.einsum("ijk,mlk->imjl", nodes, w_r)
    c_r = jnp.sum(adj, axis=-1, keepdims=True)
    c_r = jnp.where(c_r == 0.0, 1.0, c_r)
    return jnp.sum(xw_r / c_r, axis=1) + xw_0


if __name__ == "__main__":
    # Small shapes consistent with the module's forward (relation_cnt = 5)
    B, N, K, H, R = 2, 16, 32, 32, 5

    key = jax.random.PRNGKey(0)
    k_nodes, k_adj, k_w0, k_wr = jax.random.split(key, 4)

    nodes = jax.random.normal(k_nodes, (B, N, K), dtype=jnp.float32)
    # Sparse-ish binary adjacency (some rows all-zero, exercising c_r==0 path)
    adj = (jax.random.uniform(k_adj, (B, R, N, N)) < 0.2).astype(jnp.float32)

    # Deterministic kaiming_normal_-style init (fan_in, gain=sqrt(2))
    std_w0 = math.sqrt(2.0 / K)
    std_wr = math.sqrt(2.0 / (H * K))
    w_0 = std_w0 * jax.random.normal(k_w0, (H, K), dtype=jnp.float32)
    w_r = std_wr * jax.random.normal(k_wr, (R, H, K), dtype=jnp.float32)

    out = relation_graph_forward(nodes, adj, w_0, w_r)
    out = jax.block_until_ready(out)
    assert out.shape == (B, N, H)

    # Tight check against a reference at the kernel's compute precision
    # (bf16 operands, f32 accumulation) ...
    to_bf = lambda a: a.astype(jnp.bfloat16).astype(jnp.float32)
    ref_bf16 = _reference_forward(to_bf(nodes), adj, to_bf(w_0), to_bf(w_r))
    assert jnp.allclose(out, ref_bf16, atol=3e-3, rtol=3e-3), "mismatch vs bf16-precision reference"

    # ... and a loose sanity check against the full-f32 module semantics
    # (tolerance reflects the bf16 operand cast recommended by the review).
    ref_f32 = _reference_forward(nodes, adj, w_0, w_r)
    assert jnp.allclose(out, ref_f32, atol=1e-1, rtol=1e-1), "mismatch vs f32 reference"

    print("KERNEL_OK")
</pallas_src>

<mosaic_0001>
module attributes {stable_mosaic.version = 11 : i64} {
  func.func @_relation_graph_kernel(%arg0: i32, %arg1: i32, %arg2: memref<1x16x32xbf16, #tpu.memory_space<vmem>>, %arg3: memref<1x16x5xf32, #tpu.memory_space<vmem>>, %arg4: memref<32x768xbf16, #tpu.memory_space<vmem>>, %arg5: memref<1x16x128xf32, #tpu.memory_space<vmem>>) attributes {dimension_semantics = [#tpu.dimension_semantics<parallel>, #tpu.dimension_semantics<parallel>], iteration_bounds = array<i64: 2, 1>, scalar_prefetch = 0 : i64, scratch_operands = 0 : i64, tpu.core_type = #tpu.core_type<tc>, window_params = [{transform_indices = @transform_0, window_bounds = array<i64: 1, 16, 32>}, {transform_indices = @transform_1, window_bounds = array<i64: 1, 16, 5>}, {pipeline_mode = #tpu.pipeline_mode<synchronous>, transform_indices = @transform_2, window_bounds = array<i64: 32, 768>}, {transform_indices = @transform_3, window_bounds = array<i64: 1, 16, 128>}]} {
    %c0 = arith.constant 0 : index
    %c0_0 = arith.constant 0 : index
    %c0_1 = arith.constant 0 : index
    %0 = vector.load %arg2[%c0, %c0_0, %c0_1] : memref<1x16x32xbf16, #tpu.memory_space<vmem>>, vector<1x16x32xbf16>
    %1 = vector.shape_cast %0 : vector<1x16x32xbf16> to vector<16x32xbf16>
    %c0_2 = arith.constant 0 : index
    %c0_3 = arith.constant 0 : index
    %2 = vector.load %arg4[%c0_2, %c0_3] : memref<32x768xbf16, #tpu.memory_space<vmem>>, vector<32x768xbf16>
    %cst = arith.constant dense<0.000000e+00> : vector<16x768xf32>
    %3 = tpu.matmul %1, %2, %cst {dimension_numbers = #tpu.dot_dimension_numbers<[1], [0], [0], [1], [0, 0, 1, 1], [], []>} : vector<16x32xbf16>, vector<32x768xbf16>, vector<16x768xf32> -> vector<16x768xf32>
    %c0_4 = arith.constant 0 : index
    %c0_5 = arith.constant 0 : index
    %c0_6 = arith.constant 0 : index
    %4 = vector.load %arg3[%c0_4, %c0_5, %c0_6] : memref<1x16x5xf32, #tpu.memory_space<vmem>>, vector<1x16x5xf32>
    %5 = vector.shape_cast %4 : vector<1x16x5xf32> to vector<16x5xf32>
    %6 = vector.extract_strided_slice %3 {offsets = [0, 640], sizes = [16, 128], strides = [1, 1]} : vector<16x768xf32> to vector<16x128xf32>
    %7 = vector.extract_strided_slice %3 {offsets = [0, 0], sizes = [16, 128], strides = [1, 1]} : vector<16x768xf32> to vector<16x128xf32>
    %8 = vector.extract_strided_slice %5 {offsets = [0, 0], sizes = [16, 1], strides = [1, 1]} : vector<16x5xf32> to vector<16x1xf32>
    %9 = vector.broadcast %8 : vector<16x1xf32> to vector<16x128xf32>
    %10 = arith.mulf %7, %9 : vector<16x128xf32>
    %11 = arith.addf %6, %10 : vector<16x128xf32>
    %12 = vector.extract_strided_slice %3 {offsets = [0, 128], sizes = [16, 128], strides = [1, 1]} : vector<16x768xf32> to vector<16x128xf32>
    %13 = vector.extract_strided_slice %5 {offsets = [0, 1], sizes = [16, 1], strides = [1, 1]} : vector<16x5xf32> to vector<16x1xf32>
    %14 = vector.broadcast %13 : vector<16x1xf32> to vector<16x128xf32>
    %15 = arith.mulf %12, %14 : vector<16x128xf32>
    %16 = arith.addf %11, %15 : vector<16x128xf32>
    %17 = vector.extract_strided_slice %3 {offsets = [0, 256], sizes = [16, 128], strides = [1, 1]} : vector<16x768xf32> to vector<16x128xf32>
    %18 = vector.extract_strided_slice %5 {offsets = [0, 2], sizes = [16, 1], strides = [1, 1]} : vector<16x5xf32> to vector<16x1xf32>
    %19 = vector.broadcast %18 : vector<16x1xf32> to vector<16x128xf32>
    %20 = arith.mulf %17, %19 : vector<16x128xf32>
    %21 = arith.addf %16, %20 : vector<16x128xf32>
    %22 = vector.extract_strided_slice %3 {offsets = [0, 384], sizes = [16, 128], strides = [1, 1]} : vector<16x768xf32> to vector<16x128xf32>
    %23 = vector.extract_strided_slice %5 {offsets = [0, 3], sizes = [16, 1], strides = [1, 1]} : vector<16x5xf32> to vector<16x1xf32>
    %24 = vector.broadcast %23 : vector<16x1xf32> to vector<16x128xf32>
    %25 = arith.mulf %22, %24 : vector<16x128xf32>
    %26 = arith.addf %21, %25 : vector<16x128xf32>
    %27 = vector.extract_strided_slice %3 {offsets = [0, 512], sizes = [16, 128], strides = [1, 1]} : vector<16x768xf32> to vector<16x128xf32>
    %28 = vector.extract_strided_slice %5 {offsets = [0, 4], sizes = [16, 1], strides = [1, 1]} : vector<16x5xf32> to vector<16x1xf32>
    %29 = vector.broadcast %28 : vector<16x1xf32> to vector<16x128xf32>
    %30 = arith.mulf %27, %29 : vector<16x128xf32>
    %31 = arith.addf %26, %30 : vector<16x128xf32>
    %32 = vector.shape_cast %31 : vector<16x128xf32> to vector<1x16x128xf32>
    %c0_7 = arith.constant 0 : index
    %c0_8 = arith.constant 0 : index
    %c0_9 = arith.constant 0 : index
    %33 = vector.load %arg5[%c0_7, %c0_8, %c0_9] : memref<1x16x128xf32, #tpu.memory_space<vmem>>, vector<1x16x128xf32>
    tpu.vector_store %arg5[%c0_7, %c0_8, %c0_9], %32 {strides = array<i32>} : memref<1x16x128xf32, #tpu.memory_space<vmem>>, vector<1x16x128xf32>,
    return
  }
  func.func @transform_0(%arg0: i32, %arg1: i32) -> (i32, i32, i32) {
    %c0_i32 = arith.constant 0 : i32
    %c0_i32_0 = arith.constant 0 : i32
    return %arg0, %arg1, %c0_i32 : i32, i32, i32
  }
  func.func @transform_1(%arg0: i32, %arg1: i32) -> (i32, i32, i32) {
    %c0_i32 = arith.constant 0 : i32
    %c0_i32_0 = arith.constant 0 : i32
    return %arg0, %arg1, %c0_i32 : i32, i32, i32
  }
  func.func @transform_2(%arg0: i32, %arg1: i32) -> (i32, i32) {
    %c0_i32 = arith.constant 0 : i32
    %c0_i32_0 = arith.constant 0 : i32
    %c0_i32_1 = arith.constant 0 : i32
    return %c0_i32, %c0_i32_0 : i32, i32
  }
  func.func @transform_3(%arg0: i32, %arg1: i32) -> (i32, i32, i32) {
    %c0_i32 = arith.constant 0 : i32
    %c0_i32_0 = arith.constant 0 : i32
    return %arg0, %arg1, %c0_i32 : i32, i32, i32
  }
}

module attributes {stable_mosaic.version = 11 : i64} {
  func.func @_relation_graph_kernel(%arg0: i32, %arg1: i32, %arg2: memref<1x16x32xbf16, #tpu.memory_space<vmem>>, %arg3: memref<1x16x5xf32, #tpu.memory_space<vmem>>, %arg4: memref<32x768xbf16, #tpu.memory_space<vmem>>, %arg5: memref<1x16x128xf32, #tpu.memory_space<vmem>>) attributes {dimension_semantics = [#tpu.dimension_semantics<parallel>, #tpu.dimension_semantics<parallel>], iteration_bounds = array<i64: 2, 1>, scalar_prefetch = 0 : i64, scratch_operands = 0 : i64, tpu.core_type = #tpu.core_type<tc>, window_params = [{transform_indices = @transform_0, window_bounds = array<i64: 1, 16, 32>}, {transform_indices = @transform_1, window_bounds = array<i64: 1, 16, 5>}, {pipeline_mode = #tpu.pipeline_mode<synchronous>, transform_indices = @transform_2, window_bounds = array<i64: 32, 768>}, {transform_indices = @transform_3, window_bounds = array<i64: 1, 16, 128>}]} {
    %c0 = arith.constant 0 : index
    %c0_0 = arith.constant 0 : index
    %c0_1 = arith.constant 0 : index
    %0 = vector.load %arg2[%c0, %c0_0, %c0_1] : memref<1x16x32xbf16, #tpu.memory_space<vmem>>, vector<1x16x32xbf16>
    %1 = vector.shape_cast %0 : vector<1x16x32xbf16> to vector<16x32xbf16>
    %c0_2 = arith.constant 0 : index
    %c0_3 = arith.constant 0 : index
    %2 = vector.load %arg4[%c0_2, %c0_3] : memref<32x768xbf16, #tpu.memory_space<vmem>>, vector<32x768xbf16>
    %cst = arith.constant dense<0.000000e+00> : vector<16x768xf32>
    %3 = tpu.matmul %1, %2, %cst {dimension_numbers = #tpu.dot_dimension_numbers<[1], [0], [0], [1], [0, 0, 1, 1], [], []>} : vector<16x32xbf16>, vector<32x768xbf16>, vector<16x768xf32> -> vector<16x768xf32>
    %c0_4 = arith.constant 0 : index
    %c0_5 = arith.constant 0 : index
    %c0_6 = arith.constant 0 : index
    %4 = vector.load %arg3[%c0_4, %c0_5, %c0_6] : memref<1x16x5xf32, #tpu.memory_space<vmem>>, vector<1x16x5xf32>
    %5 = vector.shape_cast %4 : vector<1x16x5xf32> to vector<16x5xf32>
    %6 = vector.extract_strided_slice %3 {offsets = [0, 640], sizes = [16, 128], strides = [1, 1]} : vector<16x768xf32> to vector<16x128xf32>
    %7 = vector.extract_strided_slice %3 {offsets = [0, 0], sizes = [16, 128], strides = [1, 1]} : vector<16x768xf32> to vector<16x128xf32>
    %8 = vector.extract_strided_slice %5 {offsets = [0, 0], sizes = [16, 1], strides = [1, 1]} : vector<16x5xf32> to vector<16x1xf32>
    %9 = vector.broadcast %8 : vector<16x1xf32> to vector<16x128xf32>
    %10 = arith.mulf %7, %9 : vector<16x128xf32>
    %11 = arith.addf %6, %10 : vector<16x128xf32>
    %12 = vector.extract_strided_slice %3 {offsets = [0, 128], sizes = [16, 128], strides = [1, 1]} : vector<16x768xf32> to vector<16x128xf32>
    %13 = vector.extract_strided_slice %5 {offsets = [0, 1], sizes = [16, 1], strides = [1, 1]} : vector<16x5xf32> to vector<16x1xf32>
    %14 = vector.broadcast %13 : vector<16x1xf32> to vector<16x128xf32>
    %15 = arith.mulf %12, %14 : vector<16x128xf32>
    %16 = arith.addf %11, %15 : vector<16x128xf32>
    %17 = vector.extract_strided_slice %3 {offsets = [0, 256], sizes = [16, 128], strides = [1, 1]} : vector<16x768xf32> to vector<16x128xf32>
    %18 = vector.extract_strided_slice %5 {offsets = [0, 2], sizes = [16, 1], strides = [1, 1]} : vector<16x5xf32> to vector<16x1xf32>
    %19 = vector.broadcast %18 : vector<16x1xf32> to vector<16x128xf32>
    %20 = arith.mulf %17, %19 : vector<16x128xf32>
    %21 = arith.addf %16, %20 : vector<16x128xf32>
    %22 = vector.extract_strided_slice %3 {offsets = [0, 384], sizes = [16, 128], strides = [1, 1]} : vector<16x768xf32> to vector<16x128xf32>
    %23 = vector.extract_strided_slice %5 {offsets = [0, 3], sizes = [16, 1], strides = [1, 1]} : vector<16x5xf32> to vector<16x1xf32>
    %24 = vector.broadcast %23 : vector<16x1xf32> to vector<16x128xf32>
    %25 = arith.mulf %22, %24 : vector<16x128xf32>
    %26 = arith.addf %21, %25 : vector<16x128xf32>
    %27 = vector.extract_strided_slice %3 {offsets = [0, 512], sizes = [16, 128], strides = [1, 1]} : vector<16x768xf32> to vector<16x128xf32>
    %28 = vector.extract_strided_slice %5 {offsets = [0, 4], sizes = [16, 1], strides = [1, 1]} : vector<16x5xf32> to vector<16x1xf32>
    %29 = vector.broadcast %28 : vector<16x1xf32> to vector<16x128xf32>
    %30 = arith.mulf %27, %29 : vector<16x128xf32>
    %31 = arith.addf %26, %30 : vector<16x128xf32>
    %32 = vector.shape_cast %31 : vector<16x128xf32> to vector<1x16x128xf32>
    %c0_7 = arith.constant 0 : index
    %c0_8 = arith.constant 0 : index
    %c0_9 = arith.constant 0 : index
    %33 = vector.load %arg5[%c0_7, %c0_8, %c0_9] : memref<1x16x128xf32, #tpu.memory_space<vmem>>, vector<1x16x128xf32>
    tpu.vector_store %arg5[%c0_7, %c0_8, %c0_9], %32 {strides = array<i32>} : memref<1x16x128xf32, #tpu.memory_space<vmem>>, vector<1x16x128xf32>,
    return
  }
  func.func @transform_0(%arg0: i32, %arg1: i32) -> (i32, i32, i32) {
    %c0_i32 = arith.constant 0 : i32
    %c0_i32_0 = arith.constant 0 : i32
    return %arg0, %arg1, %c0_i32 : i32, i32, i32
  }
  func.func @transform_1(%arg0: i32, %arg1: i32) -> (i32, i32, i32) {
    %c0_i32 = arith.constant 0 : i32
    %c0_i32_0 = arith.constant 0 : i32
    return %arg0, %arg1, %c0_i32 : i32, i32, i32
  }
  func.func @transform_2(%arg0: i32, %arg1: i32) -> (i32, i32) {
    %c0_i32 = arith.constant 0 : i32
    %c0_i32_0 = arith.constant 0 : i32
    %c0_i32_1 = arith.constant 0 : i32
    return %c0_i32, %c0_i32_0 : i32, i32
  }
  func.func @transform_3(%arg0: i32, %arg1: i32) -> (i32, i32, i32) {
    %c0_i32 = arith.constant 0 : i32
    %c0_i32_0 = arith.constant 0 : i32
    return %arg0, %arg1, %c0_i32 : i32, i32, i32
  }
}

</mosaic_0001>

<llo_original>
// kernel: tpu_custom_call.1
$region0: #{tpu_custom_call.1}
  #allocation0 [shape = 'u32[]', space=smem, size = 0x4, offset = 0x4, fixed_abs, tag = 'smem constant byte address 0x4 - core index']
  #allocation1 [shape = 'u32[144,128]{1,0:T(1,128)}', space=vmem, size = 0x12000, scoped, tag = 'internal scratch']
  %s0 = inlined_call_operand.vmem [shape: bf16[2,16,32], index: 0, kind: input, shape index: {}]
  %s1 = inlined_call_operand.vmem [shape: f32[2,16,5], index: 1, kind: input, shape index: {}]
  %s2 = inlined_call_operand.hbm [shape: bf16[32,768], index: 2, kind: input, shape index: {}]
  %s3 = inlined_call_operand.hbm [shape: f32[2,16,128], index: 3, kind: output, shape index: {}]
  %s4 = sld [smem:[#allocation0]]
  $region49: #{tpu_custom_call.1} parent=0
    _
  %s6 = ssub.s32 1, %s4
  %s7 = scalar_select 0, %s6, %s4
  $region1: #{tpu_custom_call.1} parent=0
    #allocation2 [shape = 'u8[49152]{0}', space=vmem, size = 0xc000, scoped, tag = 'input window, operand 2, single buffered']
    #allocation3 [shape = 's32[2]{0}', space=sflag, size = 0x8, scoped, tag = 'scoped memory for tpu_custom_call.1']
    #allocation4 [shape = 's32[2]{0}', space=sflag, size = 0x8, scoped, tag = 'scoped memory for tpu_custom_call.1']
    #allocation5 [shape = 'u8[16384]{0}', space=vmem, size = 0x4000, scoped, tag = 'output window, operand 0']
    %8 = vsyncpa [#allocation3], 0
    %9 = vsyncpa [#allocation4], 0
    %s10 = scalar_lea.sflag [#allocation4], 1
    %11 = vsyncpa %s10, 0
    loop: start=0, step=1, limit=4
    $region2: #{tpu_custom_call.1} parent=1 // loop_pre_header
      _
    $region3: #{tpu_custom_call.1} parent=1 // loop_header
      %s13 = sphi 0, %s17
      %p14 = scmp.ge.s32.totalorder %s13, 4
      %s20 = sphi 0, %s32
      %s21 = sphi 0, %s28
      %s22 = sphi 0, %s20
      %s23 = sphi 0, %s21
      %s24 = sphi 0, %s22
      %s25 = sphi 0, %s23
      %s37 = sphi 0, %s39
      %s40 = sphi 0, %s37
      %s41 = sphi 0, %s40
      %s57 = sphi 0, %s41
      %s65 = sphi 0, %s67
      %s68 = sphi 0, %s65
      %s69 = sphi 0, %s68
      %s85 = sphi 0, %s69
      %s89 = sphi 0, %s89
      %s91 = sphi 0, %s89
      %s92 = sphi 0, %s91
      %s106 = sphi 0, %s92
      %s114 = sphi 0, %s116
      %s117 = sphi 0, %s114
      %s118 = sphi 0, %s117
      %s134 = sphi 0, %s118
    $region4: #{tpu_custom_call.1} parent=1 // loop_header_branch
      %16 = sbr.rel (%p14) target = $region8
    $region5: #{tpu_custom_call.1} parent=1 // loop_body
      %s18 = ssub.s32 %s13, 1
      %s19 = ssub.s32 %s13, 2
      %s26 = sadd.s32 1, %s21
      %p27 = scmp.ge.s32.totalorder %s26, 1
      %s28 = scalar_select %p27, 0, %s26
      %s29 = sadd.s32 1, %s20
      %s30 = scalar_select %p27, %s29, %s20
      %p31 = scmp.ge.s32.totalorder %s30, 2
      %s32 = scalar_select %p31, 0, %s30
      %s33 = ssub.s32 %s20, %s32
      %s34 = ssub.s32 %s21, %s28
      %s35 = sor.u32 %s33, %s34
      %p36 = scmp.eq.s32.totalorder %s35, 0
      %s38 = sadd.s32 %s37, 1
      %s39 = scalar_select %p36, %s37, %s38
      %p42 = pneg %p36
      %p43 = scmp.eq.s32.totalorder %s13, 1
      %p44 = por %p42, %p43
      %p45 = scmp.ne.s32.totalorder %s37, %s40
      %p46 = scmp.eq.s32.totalorder %s13, 0
      %p47 = por %p45, %p46
      %p48 = scmp.ne.s32.totalorder %s37, %s40
      %p49 = scmp.eq.s32.totalorder %s18, 1
      %p50 = por %p48, %p49
      %p51 = scmp.ne.s32.totalorder %s40, %s41
      %p52 = scmp.eq.s32.totalorder %s18, 0
      %p53 = por %p51, %p52
      %p54 = scmp.ne.s32.totalorder %s40, %s41
      %p55 = scmp.eq.s32.totalorder %s19, 1
      %p56 = por %p54, %p55
      %p58 = scmp.ne.s32.totalorder %s41, %s57
      %p59 = scmp.eq.s32.totalorder %s19, 0
      %p60 = por %p58, %p59
      %s61 = ssub.s32 %s20, %s32
      %s62 = ssub.s32 %s21, %s28
      %s63 = sor.u32 %s61, %s62
      %p64 = scmp.eq.s32.totalorder %s63, 0
      %s66 = sadd.s32 %s65, 1
      %s67 = scalar_select %p64, %s65, %s66
      %p70 = pneg %p64
      %p71 = scmp.eq.s32.totalorder %s13, 1
      %p72 = por %p70, %p71
      %p73 = scmp.ne.s32.totalorder %s65, %s68
      %p74 = scmp.eq.s32.totalorder %s13, 0
      %p75 = por %p73, %p74
      %p76 = scmp.ne.s32.totalorder %s65, %s68
      %p77 = scmp.eq.s32.totalorder %s18, 1
      %p78 = por %p76, %p77
      %p79 = scmp.ne.s32.totalorder %s68, %s69
      %p80 = scmp.eq.s32.totalorder %s18, 0
      %p81 = por %p79, %p80
      %p82 = scmp.ne.s32.totalorder %s68, %s69
      %p83 = scmp.eq.s32.totalorder %s19, 1
      %p84 = por %p82, %p83
      %p86 = scmp.ne.s32.totalorder %s69, %s85
      %p87 = scmp.eq.s32.totalorder %s19, 0
      %p88 = por %p86, %p87
      %s90 = sadd.s32 %s89, 1
      %p93 = scmp.eq.s32.totalorder %s13, 1
      %p94 = scmp.ne.s32.totalorder %s89, %s91
      %p95 = scmp.eq.s32.totalorder %s13, 0
      %p96 = por %p94, %p95
      %p97 = scmp.ne.s32.totalorder %s89, %s91
      %p98 = scmp.eq.s32.totalorder %s18, 1
      %p99 = por %p97, %p98
      %p100 = scmp.ne.s32.totalorder %s91, %s92
      %p101 = scmp.eq.s32.totalorder %s18, 0
      %p102 = por %p100, %p101
      %p103 = scmp.ne.s32.totalorder %s91, %s92
      %p104 = scmp.eq.s32.totalorder %s19, 1
      %p105 = por %p103, %p104
      %p107 = scmp.ne.s32.totalorder %s92, %s106
      %p108 = scmp.eq.s32.totalorder %s19, 0
      %p109 = por %p107, %p108
      %s110 = ssub.s32 %s20, %s32
      %s111 = ssub.s32 %s21, %s28
      %s112 = sor.u32 %s110, %s111
      %p113 = scmp.eq.s32.totalorder %s112, 0
      %s115 = sadd.s32 %s114, 1
      %s116 = scalar_select %p113, %s114, %s115
      %p119 = pneg %p113
      %p120 = scmp.eq.s32.totalorder %s13, 1
      %p121 = por %p119, %p120
      %p122 = scmp.ne.s32.totalorder %s114, %s117
      %p123 = scmp.eq.s32.totalorder %s13, 0
      %p124 = por %p122, %p123
      %p125 = scmp.ne.s32.totalorder %s114, %s117
      %p126 = scmp.eq.s32.totalorder %s18, 1
      %p127 = por %p125, %p126
      %p128 = scmp.ne.s32.totalorder %s117, %s118
      %p129 = scmp.eq.s32.totalorder %s18, 0
      %p130 = por %p128, %p129
      %p131 = scmp.ne.s32.totalorder %s117, %s118
      %p132 = scmp.eq.s32.totalorder %s19, 1
      %p133 = por %p131, %p132
      %p135 = scmp.ne.s32.totalorder %s118, %s134
      %p136 = scmp.eq.s32.totalorder %s19, 0
      %p137 = por %p135, %p136
      %p138 = scmp.le.s32.totalorder 1, %s13
      %p139 = scmp.lt.s32.totalorder %s13, 3
      %p140 = pnand %p138, %p139
      %p141 = pneg %p140
      // Predicated region
      $region9: #{tpu_custom_call.1} parent=5 // pred_check
        _
      $region10: #{tpu_custom_call.1} parent=5 // pred_check_branch
        %143 = sbr.rel (%p140) target = $region12
      $region11: #{tpu_custom_call.1} parent=5 // pred_region
        %s144 = ssub.s32 %s13, 1
        // Predicated region
        $region13: #{tpu_custom_call.1} parent=11 // pred_check
          %p145 = pneg %p102
        $region14: #{tpu_custom_call.1} parent=11 // pred_check_branch
          %147 = sbr.rel (%p145) target = $region16
        $region15: #{tpu_custom_call.1} parent=11 // pred_region
          %s149 = ssub.s32 1536, 1536
          %150 = vsyncadd [#allocation3], %s149
          %s151 = sshll.u32 [#allocation2], 4
          %s152 = int_to_ptr.vmem [resolvable:$true] %s151
          %157 = dma.hbm_to_vmem [thread:$0]  %s2, 1536, %s152, [#allocation3], 384, 384, 24
        $region16: #{tpu_custom_call.1} parent=11 // pred_fallthru
          _
      $region12: #{tpu_custom_call.1} parent=5 // pred_fallthru
        _
      %p158 = scmp.lt.s32.totalorder %s13, 2
      // Predicated region
      $region17: #{tpu_custom_call.1} parent=5 // pred_check
        %p159 = pneg %p158
      $region18: #{tpu_custom_call.1} parent=5 // pred_check_branch
        %161 = sbr.rel (%p159) target = $region20
      $region19: #{tpu_custom_call.1} parent=5 // pred_region
        // Predicated region
        $region21: #{tpu_custom_call.1} parent=19 // pred_check
          %p162 = pneg %p47
        $region22: #{tpu_custom_call.1} parent=19 // pred_check_branch
          %164 = sbr.rel (%p162) target = $region24
        $region23: #{tpu_custom_call.1} parent=19 // pred_region
          %s165 = smul.u32 2, %s21
          %p166 = scmp.lt.s32.totalorder %s20, 1
          %s167 = scalar_select %p166, %s20, 1
          %p168 = scmp.lt.s32.totalorder %s165, 1
          %s169 = scalar_select %p168, %s165, 1
          %s170 = smul.addr %s167, 2
          %s171 = sadd.s32 %s169, %s170
          %s172 = smul.addr %s171, 4
          %s173 = scalar_lea.vmem %s0, %s172
          %s174 = smul.u32 2, %s21
        $region24: #{tpu_custom_call.1} parent=19 // pred_fallthru
          _
        // Predicated region
        $region25: #{tpu_custom_call.1} parent=19 // pred_check
          %p175 = pneg %p75
        $region26: #{tpu_custom_call.1} parent=19 // pred_check_branch
          %177 = sbr.rel (%p175) target = $region28
        $region27: #{tpu_custom_call.1} parent=19 // pred_region
          %s178 = smul.u32 2, %s21
          %p179 = scmp.lt.s32.totalorder %s20, 1
          %s180 = scalar_select %p179, %s20, 1
          %p181 = scmp.lt.s32.totalorder %s178, 1
          %s182 = scalar_select %p181, %s178, 1
          %s183 = smul.addr %s180, 2
          %s184 = sadd.s32 %s182, %s183
          %s185 = smul.addr %s184, 8
          %s186 = scalar_lea.vmem %s1, %s185
          %s187 = smul.u32 2, %s21
        $region28: #{tpu_custom_call.1} parent=19 // pred_fallthru
          _
      $region20: #{tpu_custom_call.1} parent=5 // pred_fallthru
        _
      %p188 = scmp.le.s32.totalorder 1, %s13
      %p189 = scmp.lt.s32.totalorder %s13, 3
      %p190 = pnand %p188, %p189
      %p191 = pneg %p190
      // Predicated region
      $region29: #{tpu_custom_call.1} parent=5 // pred_check
        _
      $region30: #{tpu_custom_call.1} parent=5 // pred_check_branch
        %193 = sbr.rel (%p190) target = $region32
      $region31: #{tpu_custom_call.1} parent=5 // pred_region
        %s194 = ssub.s32 %s13, 1
        // Predicated region
        $region33: #{tpu_custom_call.1} parent=31 // pred_check
          %p195 = pneg %p102
        $region34: #{tpu_custom_call.1} parent=31 // pred_check_branch
          %197 = sbr.rel (%p195) target = $region36
        $region35: #{tpu_custom_call.1} parent=31 // pred_region
          %198 = dma.done [#allocation3], 1536
        $region36: #{tpu_custom_call.1} parent=31 // pred_fallthru
          _
        %s199 = smul.u32 2, %s23
        %p200 = scmp.lt.s32.totalorder %s22, 1
        %s201 = scalar_select %p200, %s22, 1
        %p202 = scmp.lt.s32.totalorder %s199, 1
        %s203 = scalar_select %p202, %s199, 1
        %s204 = smul.addr %s201, 2
        %s205 = sadd.s32 %s203, %s204
        %s206 = smul.addr %s205, 4
        %s207 = scalar_lea.vmem %s0, %s206
        %p208 = pneg %p53
        %p209 = pneg %p50
        %s210 = smul.u32 2, %s23
        %p211 = scmp.lt.s32.totalorder %s22, 1
        %s212 = scalar_select %p211, %s22, 1
        %p213 = scmp.lt.s32.totalorder %s210, 1
        %s214 = scalar_select %p213, %s210, 1
        %s215 = smul.addr %s212, 2
        %s216 = sadd.s32 %s214, %s215
        %s217 = smul.addr %s216, 8
        %s218 = scalar_lea.vmem %s1, %s217
        %p219 = pneg %p81
        %p220 = pneg %p78
        %p221 = pneg %p102
        %p222 = pneg %p99
        %p223 = pneg %p130
        %p224 = pneg %p127
        %s225 = sand.u32 %s117, 1
        %s226 = scalar_lea.sflag [#allocation4], %s225
        %s227 = sand.u32 %s117, 1
        %s228 = smul.addr %s227, 16
        %s229 = scalar_lea.vmem [#allocation5], %s228
        %s230 = smul.u32 2, %s23
        %p231 = scmp.lt.s32.totalorder %s22, 1
        %s232 = scalar_select %p231, %s22, 1
        %p233 = scmp.lt.s32.totalorder %s230, 1
        %s234 = scalar_select %p233, %s230, 1
        %s235 = smul.addr %s232, 2
        %s236 = sadd.s32 %s234, %s235
        %s237 = smul.addr %s236, 4
        %s238 = scalar_lea.vmem %s0, %s237
        %s239 = smul.u32 2, %s23
        %s240 = smul.u32 2, %s23
        %p241 = scmp.lt.s32.totalorder %s22, 1
        %s242 = scalar_select %p241, %s22, 1
        %p243 = scmp.lt.s32.totalorder %s240, 1
        %s244 = scalar_select %p243, %s240, 1
        %s245 = smul.addr %s242, 2
        %s246 = sadd.s32 %s244, %s245
        %s247 = smul.addr %s246, 8
        %s248 = scalar_lea.vmem %s1, %s247
        %s249 = smul.u32 2, %s23
        %s250 = smul.u32 2, %s23
        %v252 = vld [vmem:[%s238] sm:$0xf]
        %v253 = vld [vmem:[%s238 + $0x4] sm:$0xf]
        %v254 = vld [vmem:[#allocation2] sm:$0xff]
        %v255 = vld [vmem:[#allocation2 + $0x8] sm:$0xff]
        %v256 = vld [vmem:[#allocation2 + $0x10] sm:$0xff]
        %v257 = vld [vmem:[#allocation2 + $0x18] sm:$0xff]
        %v258 = vld [vmem:[#allocation2 + $0x20] sm:$0xff]
        %v259 = vld [vmem:[#allocation2 + $0x28] sm:$0xff]
        %v260 = vld [vmem:[#allocation2 + $0x30] sm:$0xff]
        %v261 = vld [vmem:[#allocation2 + $0x38] sm:$0xff]
        %v262 = vld [vmem:[#allocation2 + $0x40] sm:$0xff]
        %v263 = vld [vmem:[#allocation2 + $0x48] sm:$0xff]
        %v264 = vld [vmem:[#allocation2 + $0x50] sm:$0xff]
        %v265 = vld [vmem:[#allocation2 + $0x58] sm:$0xff]
        %v268 = vunpack.c.l.b16 %v252
        %v269 = vunpack.c.l.b16 %v253
        %v270 = vpack.c.b16 %v269, %v268
        %v283 = vunpack.c.l.b16 %v254
        %v284 = vunpack.c.h.b16 %v254
        %v285 = vunpack.c.l.b16 %v255
        %v286 = vunpack.c.h.b16 %v255
        %v287 = vunpack.c.l.b16 %v256
        %v288 = vunpack.c.h.b16 %v256
        %v289 = vunpack.c.l.b16 %v257
        %v290 = vunpack.c.h.b16 %v257
        %v291 = vunpack.c.l.b16 %v258
        %v292 = vunpack.c.h.b16 %v258
        %v293 = vunpack.c.l.b16 %v259
        %v294 = vunpack.c.h.b16 %v259
        %v295 = vunpack.c.l.b16 %v260
        %v296 = vunpack.c.h.b16 %v260
        %v297 = vunpack.c.l.b16 %v261
        %v298 = vunpack.c.h.b16 %v261
        %v299 = vunpack.c.l.b16 %v262
        %v300 = vunpack.c.h.b16 %v262
        %v301 = vunpack.c.l.b16 %v263
        %v302 = vunpack.c.h.b16 %v263
        %v303 = vunpack.c.l.b16 %v264
        %v304 = vunpack.c.h.b16 %v264
        %v305 = vunpack.c.l.b16 %v265
        %v306 = vunpack.c.h.b16 %v265
        %v307 = vpack.c.b16 %v289, %v283
        %v308 = vpack.c.b16 %v290, %v284
        %v309 = vpack.c.b16 %v291, %v285
        %v310 = vpack.c.b16 %v292, %v286
        %v311 = vpack.c.b16 %v293, %v287
        %v312 = vpack.c.b16 %v294, %v288
        %v313 = vpack.c.b16 %v301, %v295
        %v314 = vpack.c.b16 %v302, %v296
        %v315 = vpack.c.b16 %v303, %v297
        %v316 = vpack.c.b16 %v304, %v298
        %v317 = vpack.c.b16 %v305, %v299
        %v318 = vpack.c.b16 %v306, %v300
        %vm331 = vcmask 261120
        %v333 = vsel %vm331, %v270, 0
        %335 = vmatprep.subr.bf16.mxu0 %v308
        %336 = vmatpush1.bf16.msra.mxu0 %v307
        %337 = vmatprep.subr.bf16.mxu0 %v314
        %338 = vmatpush1.bf16.msra.mxu0 %v313
        %339 = vmatprep.subr.bf16.mxu0 0
        %340 = vmatpush1.bf16.msra.mxu0 0
        %341 = vmatprep.subr.bf16.mxu0 0
        %342 = vmatpush1.bf16.msra.mxu0 0
        %343 = vmatprep.subr.bf16.mxu0 0
        %344 = vmatpush1.bf16.msra.mxu0 0
        %345 = vmatprep.subr.bf16.mxu0 0
        %346 = vmatpush1.bf16.msra.mxu0 0
        %347 = vmatprep.subr.bf16.mxu0 0
        %348 = vmatpush1.bf16.msra.mxu0 0
        %349 = vmatprep.subr.bf16.mxu0 0
        %350 = vmatpush1.bf16.msra.mxu0 0
        %351 = vmatprep.subr.bf16.mxu0 0
        %352 = vmatpush1.bf16.msra.mxu0 0
        %353 = vmatprep.subr.bf16.mxu0 0
        %354 = vmatpush1.bf16.msra.mxu0 0
        %355 = vmatprep.subr.bf16.mxu0 0
        %356 = vmatpush1.bf16.msra.mxu0 0
        %357 = vmatprep.subr.bf16.mxu0 0
        %358 = vmatpush1.bf16.msra.mxu0 0
        %359 = vmatprep.subr.bf16.mxu0 0
        %360 = vmatpush1.bf16.msra.mxu0 0
        %361 = vmatprep.subr.bf16.mxu0 0
        %362 = vmatpush1.bf16.msra.mxu0 0
        %363 = vmatprep.subr.bf16.mxu0 0
        %364 = vmatpush1.bf16.msra.mxu0 0
        %365 = vmatprep.subr.bf16.mxu0 0
        %366 = vmatpush1.bf16.msra.mxu0 0
        %367 = vmatprep.mubr.bf16.mxu0 0
        %368 = vmatmul.mubr.bf16.gmra.mrb[0].mxu0 %v333
        %v369 = vpop.f32.mrb[0].mxu0
        %v370 = vadd.f32 0.0, %v369
        %v371 = vpop.f32.mrb[0].mxu0
        %v372 = vadd.f32 0.0, %v371
        %v373 = vpop.f32.mrb[0].mxu0
        %v374 = vadd.f32 0.0, %v373
        %v375 = vpop.f32.mrb[0].mxu0
        %v376 = vadd.f32 0.0, %v375
        %377 = vdwg.mxu0
        %378 = vmatprep.subr.bf16.mxu0 %v310
        %379 = vmatpush1.bf16.msra.mxu0 %v309
        %380 = vmatprep.subr.bf16.mxu0 %v316
        %381 = vmatpush1.bf16.msra.mxu0 %v315
        %382 = vmatprep.subr.bf16.mxu0 0
        %383 = vmatpush1.bf16.msra.mxu0 0
        %384 = vmatprep.subr.bf16.mxu0 0
        %385 = vmatpush1.bf16.msra.mxu0 0
        %386 = vmatprep.subr.bf16.mxu0 0
        %387 = vmatpush1.bf16.msra.mxu0 0
        %388 = vmatprep.subr.bf16.mxu0 0
        %389 = vmatpush1.bf16.msra.mxu0 0
        %390 = vmatprep.subr.bf16.mxu0 0
        %391 = vmatpush1.bf16.msra.mxu0 0
        %392 = vmatprep.subr.bf16.mxu0 0
        %393 = vmatpush1.bf16.msra.mxu0 0
        %394 = vmatprep.subr.bf16.mxu0 0
        %395 = vmatpush1.bf16.msra.mxu0 0
        %396 = vmatprep.subr.bf16.mxu0 0
        %397 = vmatpush1.bf16.msra.mxu0 0
        %398 = vmatprep.subr.bf16.mxu0 0
        %399 = vmatpush1.bf16.msra.mxu0 0
        %400 = vmatprep.subr.bf16.mxu0 0
        %401 = vmatpush1.bf16.msra.mxu0 0
        %402 = vmatprep.subr.bf16.mxu0 0
        %403 = vmatpush1.bf16.msra.mxu0 0
        %404 = vmatprep.subr.bf16.mxu0 0
        %405 = vmatpush1.bf16.msra.mxu0 0
        %406 = vmatprep.subr.bf16.mxu0 0
        %407 = vmatpush1.bf16.msra.mxu0 0
        %408 = vmatprep.subr.bf16.mxu0 0
        %409 = vmatpush1.bf16.msra.mxu0 0
        %410 = vmatprep.mubr.bf16.mxu0 0
        %411 = vmatmul.mubr.bf16.gmra.mrb[0].mxu0 %v333
        %v412 = vpop.f32.mrb[0].mxu0
        %v413 = vadd.f32 0.0, %v412
        %v414 = vpop.f32.mrb[0].mxu0
        %v415 = vadd.f32 0.0, %v414
        %v416 = vpop.f32.mrb[0].mxu0
        %v417 = vadd.f32 0.0, %v416
        %v418 = vpop.f32.mrb[0].mxu0
        %v419 = vadd.f32 0.0, %v418
        %420 = vdwg.mxu0
        %421 = vmatprep.subr.bf16.mxu0 %v312
        %422 = vmatpush1.bf16.msra.mxu0 %v311
        %423 = vmatprep.subr.bf16.mxu0 %v318
        %424 = vmatpush1.bf16.msra.mxu0 %v317
        %425 = vmatprep.subr.bf16.mxu0 0
        %426 = vmatpush1.bf16.msra.mxu0 0
        %427 = vmatprep.subr.bf16.mxu0 0
        %428 = vmatpush1.bf16.msra.mxu0 0
        %429 = vmatprep.subr.bf16.mxu0 0
        %430 = vmatpush1.bf16.msra.mxu0 0
        %431 = vmatprep.subr.bf16.mxu0 0
        %432 = vmatpush1.bf16.msra.mxu0 0
        %433 = vmatprep.subr.bf16.mxu0 0
        %434 = vmatpush1.bf16.msra.mxu0 0
        %435 = vmatprep.subr.bf16.mxu0 0
        %436 = vmatpush1.bf16.msra.mxu0 0
        %437 = vmatprep.subr.bf16.mxu0 0
        %438 = vmatpush1.bf16.msra.mxu0 0
        %439 = vmatprep.subr.bf16.mxu0 0
        %440 = vmatpush1.bf16.msra.mxu0 0
        %441 = vmatprep.subr.bf16.mxu0 0
        %442 = vmatpush1.bf16.msra.mxu0 0
        %443 = vmatprep.subr.bf16.mxu0 0
        %444 = vmatpush1.bf16.msra.mxu0 0
        %445 = vmatprep.subr.bf16.mxu0 0
        %446 = vmatpush1.bf16.msra.mxu0 0
        %447 = vmatprep.subr.bf16.mxu0 0
        %448 = vmatpush1.bf16.msra.mxu0 0
        %449 = vmatprep.subr.bf16.mxu0 0
        %450 = vmatpush1.bf16.msra.mxu0 0
        %451 = vmatprep.subr.bf16.mxu0 0
        %452 = vmatpush1.bf16.msra.mxu0 0
        %453 = vmatprep.mubr.bf16.mxu0 0
        %454 = vmatmul.mubr.bf16.gmra.mrb[0].mxu0 %v333
        %v455 = vpop.f32.mrb[0].mxu0
        %v456 = vadd.f32 0.0, %v455
        %v457 = vpop.f32.mrb[0].mxu0
        %v458 = vadd.f32 0.0, %v457
        %v459 = vpop.f32.mrb[0].mxu0
        %v460 = vadd.f32 0.0, %v459
        %v461 = vpop.f32.mrb[0].mxu0
        %v462 = vadd.f32 0.0, %v461
        %463 = vdwg.mxu0
        %v464 = vld [vmem:[%s248] sm:$0xff]
        %v465 = vld [vmem:[%s248 + $0x8] sm:$0xff]
        %467 = vset.pattern.permute.xlu0 0
        %468 = vperm.xlu0 %467, %v464
        %v469 = vpop.permute.xlu0 %468
        %472 = vset.pattern.permute.xlu0 0
        %473 = vperm.xlu0 %472, %v465
        %v474 = vpop.permute.xlu0 %473
        %v476 = vmul.f32 %v370, %v469
        %v477 = vmul.f32 %v374, %v474
        %v478 = vadd.f32 %v458, %v476
        %v479 = vadd.f32 %v462, %v477
        %480 = vset.pattern.permute.xlu0 1
        %481 = vperm.xlu0 %480, %v464
        %v482 = vpop.permute.xlu0 %481
        %484 = vset.pattern.permute.xlu0 1
        %485 = vperm.xlu0 %484, %v465
        %v486 = vpop.permute.xlu0 %485
        %v488 = vmul.f32 %v372, %v482
        %v489 = vmul.f32 %v376, %v486
        %v490 = vadd.f32 %v478, %v488
        %v491 = vadd.f32 %v479, %v489
        %492 = vset.pattern.permute.xlu0 2
        %493 = vperm.xlu0 %492, %v464
        %v494 = vpop.permute.xlu0 %493
        %496 = vset.pattern.permute.xlu0 2
        %497 = vperm.xlu0 %496, %v465
        %v498 = vpop.permute.xlu0 %497
        %v500 = vmul.f32 %v413, %v494
        %v501 = vmul.f32 %v417, %v498
        %v502 = vadd.f32 %v490, %v500
        %v503 = vadd.f32 %v491, %v501
        %504 = vset.pattern.permute.xlu0 3
        %505 = vperm.xlu0 %504, %v464
        %v506 = vpop.permute.xlu0 %505
        %508 = vset.pattern.permute.xlu0 3
        %509 = vperm.xlu0 %508, %v465
        %v510 = vpop.permute.xlu0 %509
        %v512 = vmul.f32 %v415, %v506
        %v513 = vmul.f32 %v419, %v510
        %v514 = vadd.f32 %v502, %v512
        %v515 = vadd.f32 %v503, %v513
        %516 = vset.pattern.permute.xlu0 4
        %517 = vperm.xlu0 %516, %v464
        %v518 = vpop.permute.xlu0 %517
        %520 = vset.pattern.permute.xlu0 4
        %521 = vperm.xlu0 %520, %v465
        %v522 = vpop.permute.xlu0 %521
        %v524 = vmul.f32 %v456, %v518
        %v525 = vmul.f32 %v460, %v522
        %v526 = vadd.f32 %v514, %v524
        %v527 = vadd.f32 %v515, %v525
        %528 = vst [vmem:[%s229] sm:$0xff] %v526
        %529 = vst [vmem:[%s229 + $0x8] sm:$0xff] %v527
        %s530 = sand.u32 %s117, 1
        %s531 = scalar_lea.sflag [#allocation4], %s530
        %s532 = sand.u32 %s117, 1
        %s533 = smul.addr %s532, 16
        %s534 = scalar_lea.vmem [#allocation5], %s533
        // Predicated region
        $region37: #{tpu_custom_call.1} parent=31 // pred_check
          %p535 = pneg %p127
        $region38: #{tpu_custom_call.1} parent=31 // pred_check_branch
          %537 = sbr.rel (%p535) target = $region40
        $region39: #{tpu_custom_call.1} parent=31 // pred_region
          %s538 = smul.u32 2, %s23
          %s540 = ssub.s32 256, 256
          %541 = vsyncadd %s531, %s540
          %s542 = smul.addr %s22, 2
          %s543 = sadd.s32 %s538, %s542
          %s544 = smul.addr %s543, 128
          %s545 = scalar_lea.hbm %s3, %s544
          %s546 = sshll.u32 %s534, 4
          %s547 = int_to_ptr.vmem [resolvable:$true] %s546
          %552 = dma.vmem_to_hbm [thread:$0]  %s547, 256, %s545, %s531, 128, 128, 8
        $region40: #{tpu_custom_call.1} parent=31 // pred_fallthru
          _
      $region32: #{tpu_custom_call.1} parent=5 // pred_fallthru
        _
      %p553 = scmp.le.s32.totalorder 2, %s13
      // Predicated region
      $region41: #{tpu_custom_call.1} parent=5 // pred_check
        %p554 = pneg %p553
      $region42: #{tpu_custom_call.1} parent=5 // pred_check_branch
        %556 = sbr.rel (%p554) target = $region44
      $region43: #{tpu_custom_call.1} parent=5 // pred_region
        %s557 = ssub.s32 %s13, 2
        // Predicated region
        $region45: #{tpu_custom_call.1} parent=43 // pred_check
          %p558 = pneg %p133
        $region46: #{tpu_custom_call.1} parent=43 // pred_check_branch
          %560 = sbr.rel (%p558) target = $region48
        $region47: #{tpu_custom_call.1} parent=43 // pred_region
          %s561 = sand.u32 %s118, 1
          %s562 = scalar_lea.sflag [#allocation4], %s561
          %s563 = sand.u32 %s118, 1
          %s564 = smul.addr %s563, 16
          %s565 = scalar_lea.vmem [#allocation5], %s564
          %566 = dma.done %s562, 256
        $region48: #{tpu_custom_call.1} parent=43 // pred_fallthru
          _
      $region44: #{tpu_custom_call.1} parent=5 // pred_fallthru
        _
    $region6: #{tpu_custom_call.1} parent=1 // loop_footer
      %s17 = sadd.s32 1, %s13
    $region7: #{tpu_custom_call.1} parent=1 // loop_footer_branch
      %12 = sbr.rel target = $region3
    $region8: #{tpu_custom_call.1} parent=1 // loop_exit
      _
    %567 = vsyncpa [#allocation3], 1
    %s568 = scalar_lea.sflag [#allocation3], 1
    %569 = vsyncpa %s568, 1
    %570 = vsyncpa [#allocation4], 1
    %s571 = scalar_lea.sflag [#allocation4], 1
    %572 = vsyncpa %s571, 1

// kernel: tpu_custom_call.1
$region0: #{tpu_custom_call.1}
  #allocation0 [shape = 'u32[]', space=smem, size = 0x4, offset = 0x4, fixed_abs, tag = 'smem constant byte address 0x4 - core index']
  #allocation1 [shape = 'u32[144,128]{1,0:T(1,128)}', space=vmem, size = 0x12000, scoped, tag = 'internal scratch']
  %s0 = inlined_call_operand.vmem [shape: bf16[2,16,32], index: 0, kind: input, shape index: {}]
  %s1 = inlined_call_operand.vmem [shape: f32[2,16,5], index: 1, kind: input, shape index: {}]
  %s2 = inlined_call_operand.hbm [shape: bf16[32,768], index: 2, kind: input, shape index: {}]
  %s3 = inlined_call_operand.hbm [shape: f32[2,16,128], index: 3, kind: output, shape index: {}]
  %s4 = sld [smem:[#allocation0]]
  $region49: #{tpu_custom_call.1} parent=0
    _
  %s6 = ssub.s32 1, %s4
  %s7 = scalar_select 0, %s6, %s4
  $region1: #{tpu_custom_call.1} parent=0
    #allocation2 [shape = 'u8[49152]{0}', space=vmem, size = 0xc000, scoped, tag = 'input window, operand 2, single buffered']
    #allocation3 [shape = 's32[2]{0}', space=sflag, size = 0x8, scoped, tag = 'scoped memory for tpu_custom_call.1']
    #allocation4 [shape = 's32[2]{0}', space=sflag, size = 0x8, scoped, tag = 'scoped memory for tpu_custom_call.1']
    #allocation5 [shape = 'u8[16384]{0}', space=vmem, size = 0x4000, scoped, tag = 'output window, operand 0']
    %8 = vsyncpa [#allocation3], 0
    %9 = vsyncpa [#allocation4], 0
    %s10 = scalar_lea.sflag [#allocation4], 1
    %11 = vsyncpa %s10, 0
    loop: start=0, step=1, limit=4
    $region2: #{tpu_custom_call.1} parent=1 // loop_pre_header
      _
    $region3: #{tpu_custom_call.1} parent=1 // loop_header
      %s13 = sphi 0, %s17
      %p14 = scmp.ge.s32.totalorder %s13, 4
      %s20 = sphi 0, %s32
      %s21 = sphi 0, %s28
      %s22 = sphi 0, %s20
      %s23 = sphi 0, %s21
      %s24 = sphi 0, %s22
      %s25 = sphi 0, %s23
      %s37 = sphi 0, %s39
      %s40 = sphi 0, %s37
      %s41 = sphi 0, %s40
      %s57 = sphi 0, %s41
      %s65 = sphi 0, %s67
      %s68 = sphi 0, %s65
      %s69 = sphi 0, %s68
      %s85 = sphi 0, %s69
      %s89 = sphi 0, %s89
      %s91 = sphi 0, %s89
      %s92 = sphi 0, %s91
      %s106 = sphi 0, %s92
      %s114 = sphi 0, %s116
      %s117 = sphi 0, %s114
      %s118 = sphi 0, %s117
      %s134 = sphi 0, %s118
    $region4: #{tpu_custom_call.1} parent=1 // loop_header_branch
      %16 = sbr.rel (%p14) target = $region8
    $region5: #{tpu_custom_call.1} parent=1 // loop_body
      %s18 = ssub.s32 %s13, 1
      %s19 = ssub.s32 %s13, 2
      %s26 = sadd.s32 1, %s21
      %p27 = scmp.ge.s32.totalorder %s26, 1
      %s28 = scalar_select %p27, 0, %s26
      %s29 = sadd.s32 1, %s20
      %s30 = scalar_select %p27, %s29, %s20
      %p31 = scmp.ge.s32.totalorder %s30, 2
      %s32 = scalar_select %p31, 0, %s30
      %s33 = ssub.s32 %s20, %s32
      %s34 = ssub.s32 %s21, %s28
      %s35 = sor.u32 %s33, %s34
      %p36 = scmp.eq.s32.totalorder %s35, 0
      %s38 = sadd.s32 %s37, 1
      %s39 = scalar_select %p36, %s37, %s38
      %p42 = pneg %p36
      %p43 = scmp.eq.s32.totalorder %s13, 1
      %p44 = por %p42, %p43
      %p45 = scmp.ne.s32.totalorder %s37, %s40
      %p46 = scmp.eq.s32.totalorder %s13, 0
      %p47 = por %p45, %p46
      %p48 = scmp.ne.s32.totalorder %s37, %s40
      %p49 = scmp.eq.s32.totalorder %s18, 1
      %p50 = por %p48, %p49
      %p51 = scmp.ne.s32.totalorder %s40, %s41
      %p52 = scmp.eq.s32.totalorder %s18, 0
      %p53 = por %p51, %p52
      %p54 = scmp.ne.s32.totalorder %s40, %s41
      %p55 = scmp.eq.s32.totalorder %s19, 1
      %p56 = por %p54, %p55
      %p58 = scmp.ne.s32.totalorder %s41, %s57
      %p59 = scmp.eq.s32.totalorder %s19, 0
      %p60 = por %p58, %p59
      %s61 = ssub.s32 %s20, %s32
      %s62 = ssub.s32 %s21, %s28
      %s63 = sor.u32 %s61, %s62
      %p64 = scmp.eq.s32.totalorder %s63, 0
      %s66 = sadd.s32 %s65, 1
      %s67 = scalar_select %p64, %s65, %s66
      %p70 = pneg %p64
      %p71 = scmp.eq.s32.totalorder %s13, 1
      %p72 = por %p70, %p71
      %p73 = scmp.ne.s32.totalorder %s65, %s68
      %p74 = scmp.eq.s32.totalorder %s13, 0
      %p75 = por %p73, %p74
      %p76 = scmp.ne.s32.totalorder %s65, %s68
      %p77 = scmp.eq.s32.totalorder %s18, 1
      %p78 = por %p76, %p77
      %p79 = scmp.ne.s32.totalorder %s68, %s69
      %p80 = scmp.eq.s32.totalorder %s18, 0
      %p81 = por %p79, %p80
      %p82 = scmp.ne.s32.totalorder %s68, %s69
      %p83 = scmp.eq.s32.totalorder %s19, 1
      %p84 = por %p82, %p83
      %p86 = scmp.ne.s32.totalorder %s69, %s85
      %p87 = scmp.eq.s32.totalorder %s19, 0
      %p88 = por %p86, %p87
      %s90 = sadd.s32 %s89, 1
      %p93 = scmp.eq.s32.totalorder %s13, 1
      %p94 = scmp.ne.s32.totalorder %s89, %s91
      %p95 = scmp.eq.s32.totalorder %s13, 0
      %p96 = por %p94, %p95
      %p97 = scmp.ne.s32.totalorder %s89, %s91
      %p98 = scmp.eq.s32.totalorder %s18, 1
      %p99 = por %p97, %p98
      %p100 = scmp.ne.s32.totalorder %s91, %s92
      %p101 = scmp.eq.s32.totalorder %s18, 0
      %p102 = por %p100, %p101
      %p103 = scmp.ne.s32.totalorder %s91, %s92
      %p104 = scmp.eq.s32.totalorder %s19, 1
      %p105 = por %p103, %p104
      %p107 = scmp.ne.s32.totalorder %s92, %s106
      %p108 = scmp.eq.s32.totalorder %s19, 0
      %p109 = por %p107, %p108
      %s110 = ssub.s32 %s20, %s32
      %s111 = ssub.s32 %s21, %s28
      %s112 = sor.u32 %s110, %s111
      %p113 = scmp.eq.s32.totalorder %s112, 0
      %s115 = sadd.s32 %s114, 1
      %s116 = scalar_select %p113, %s114, %s115
      %p119 = pneg %p113
      %p120 = scmp.eq.s32.totalorder %s13, 1
      %p121 = por %p119, %p120
      %p122 = scmp.ne.s32.totalorder %s114, %s117
      %p123 = scmp.eq.s32.totalorder %s13, 0
      %p124 = por %p122, %p123
      %p125 = scmp.ne.s32.totalorder %s114, %s117
      %p126 = scmp.eq.s32.totalorder %s18, 1
      %p127 = por %p125, %p126
      %p128 = scmp.ne.s32.totalorder %s117, %s118
      %p129 = scmp.eq.s32.totalorder %s18, 0
      %p130 = por %p128, %p129
      %p131 = scmp.ne.s32.totalorder %s117, %s118
      %p132 = scmp.eq.s32.totalorder %s19, 1
      %p133 = por %p131, %p132
      %p135 = scmp.ne.s32.totalorder %s118, %s134
      %p136 = scmp.eq.s32.totalorder %s19, 0
      %p137 = por %p135, %p136
      %p138 = scmp.le.s32.totalorder 1, %s13
      %p139 = scmp.lt.s32.totalorder %s13, 3
      %p140 = pnand %p138, %p139
      %p141 = pneg %p140
      // Predicated region
      $region9: #{tpu_custom_call.1} parent=5 // pred_check
        _
      $region10: #{tpu_custom_call.1} parent=5 // pred_check_branch
        %143 = sbr.rel (%p140) target = $region12
      $region11: #{tpu_custom_call.1} parent=5 // pred_region
        %s144 = ssub.s32 %s13, 1
        // Predicated region
        $region13: #{tpu_custom_call.1} parent=11 // pred_check
          %p145 = pneg %p102
        $region14: #{tpu_custom_call.1} parent=11 // pred_check_branch
          %147 = sbr.rel (%p145) target = $region16
        $region15: #{tpu_custom_call.1} parent=11 // pred_region
          %s149 = ssub.s32 1536, 1536
          %150 = vsyncadd [#allocation3], %s149
          %s151 = sshll.u32 [#allocation2], 4
          %s152 = int_to_ptr.vmem [resolvable:$true] %s151
          %157 = dma.hbm_to_vmem [thread:$0]  %s2, 1536, %s152, [#allocation3], 384, 384, 24
        $region16: #{tpu_custom_call.1} parent=11 // pred_fallthru
          _
      $region12: #{tpu_custom_call.1} parent=5 // pred_fallthru
        _
      %p158 = scmp.lt.s32.totalorder %s13, 2
      // Predicated region
      $region17: #{tpu_custom_call.1} parent=5 // pred_check
        %p159 = pneg %p158
      $region18: #{tpu_custom_call.1} parent=5 // pred_check_branch
        %161 = sbr.rel (%p159) target = $region20
      $region19: #{tpu_custom_call.1} parent=5 // pred_region
        // Predicated region
        $region21: #{tpu_custom_call.1} parent=19 // pred_check
          %p162 = pneg %p47
        $region22: #{tpu_custom_call.1} parent=19 // pred_check_branch
          %164 = sbr.rel (%p162) target = $region24
        $region23: #{tpu_custom_call.1} parent=19 // pred_region
          %s165 = smul.u32 2, %s21
          %p166 = scmp.lt.s32.totalorder %s20, 1
          %s167 = scalar_select %p166, %s20, 1
          %p168 = scmp.lt.s32.totalorder %s165, 1
          %s169 = scalar_select %p168, %s165, 1
          %s170 = smul.addr %s167, 2
          %s171 = sadd.s32 %s169, %s170
          %s172 = smul.addr %s171, 4
          %s173 = scalar_lea.vmem %s0, %s172
          %s174 = smul.u32 2, %s21
        $region24: #{tpu_custom_call.1} parent=19 // pred_fallthru
          _
        // Predicated region
        $region25: #{tpu_custom_call.1} parent=19 // pred_check
          %p175 = pneg %p75
        $region26: #{tpu_custom_call.1} parent=19 // pred_check_branch
          %177 = sbr.rel (%p175) target = $region28
        $region27: #{tpu_custom_call.1} parent=19 // pred_region
          %s178 = smul.u32 2, %s21
          %p179 = scmp.lt.s32.totalorder %s20, 1
          %s180 = scalar_select %p179, %s20, 1
          %p181 = scmp.lt.s32.totalorder %s178, 1
          %s182 = scalar_select %p181, %s178, 1
          %s183 = smul.addr %s180, 2
          %s184 = sadd.s32 %s182, %s183
          %s185 = smul.addr %s184, 8
          %s186 = scalar_lea.vmem %s1, %s185
          %s187 = smul.u32 2, %s21
        $region28: #{tpu_custom_call.1} parent=19 // pred_fallthru
          _
      $region20: #{tpu_custom_call.1} parent=5 // pred_fallthru
        _
      %p188 = scmp.le.s32.totalorder 1, %s13
      %p189 = scmp.lt.s32.totalorder %s13, 3
      %p190 = pnand %p188, %p189
      %p191 = pneg %p190
      // Predicated region
      $region29: #{tpu_custom_call.1} parent=5 // pred_check
        _
      $region30: #{tpu_custom_call.1} parent=5 // pred_check_branch
        %193 = sbr.rel (%p190) target = $region32
      $region31: #{tpu_custom_call.1} parent=5 // pred_region
        %s194 = ssub.s32 %s13, 1
        // Predicated region
        $region33: #{tpu_custom_call.1} parent=31 // pred_check
          %p195 = pneg %p102
        $region34: #{tpu_custom_call.1} parent=31 // pred_check_branch
          %197 = sbr.rel (%p195) target = $region36
        $region35: #{tpu_custom_call.1} parent=31 // pred_region
          %198 = dma.done [#allocation3], 1536
        $region36: #{tpu_custom_call.1} parent=31 // pred_fallthru
          _
        %s199 = smul.u32 2, %s23
        %p200 = scmp.lt.s32.totalorder %s22, 1
        %s201 = scalar_select %p200, %s22, 1
        %p202 = scmp.lt.s32.totalorder %s199, 1
        %s203 = scalar_select %p202, %s199, 1
        %s204 = smul.addr %s201, 2
        %s205 = sadd.s32 %s203, %s204
        %s206 = smul.addr %s205, 4
        %s207 = scalar_lea.vmem %s0, %s206
        %p208 = pneg %p53
        %p209 = pneg %p50
        %s210 = smul.u32 2, %s23
        %p211 = scmp.lt.s32.totalorder %s22, 1
        %s212 = scalar_select %p211, %s22, 1
        %p213 = scmp.lt.s32.totalorder %s210, 1
        %s214 = scalar_select %p213, %s210, 1
        %s215 = smul.addr %s212, 2
        %s216 = sadd.s32 %s214, %s215
        %s217 = smul.addr %s216, 8
        %s218 = scalar_lea.vmem %s1, %s217
        %p219 = pneg %p81
        %p220 = pneg %p78
        %p221 = pneg %p102
        %p222 = pneg %p99
        %p223 = pneg %p130
        %p224 = pneg %p127
        %s225 = sand.u32 %s117, 1
        %s226 = scalar_lea.sflag [#allocation4], %s225
        %s227 = sand.u32 %s117, 1
        %s228 = smul.addr %s227, 16
        %s229 = scalar_lea.vmem [#allocation5], %s228
        %s230 = smul.u32 2, %s23
        %p231 = scmp.lt.s32.totalorder %s22, 1
        %s232 = scalar_select %p231, %s22, 1
        %p233 = scmp.lt.s32.totalorder %s230, 1
        %s234 = scalar_select %p233, %s230, 1
        %s235 = smul.addr %s232, 2
        %s236 = sadd.s32 %s234, %s235
        %s237 = smul.addr %s236, 4
        %s238 = scalar_lea.vmem %s0, %s237
        %s239 = smul.u32 2, %s23
        %s240 = smul.u32 2, %s23
        %p241 = scmp.lt.s32.totalorder %s22, 1
        %s242 = scalar_select %p241, %s22, 1
        %p243 = scmp.lt.s32.totalorder %s240, 1
        %s244 = scalar_select %p243, %s240, 1
        %s245 = smul.addr %s242, 2
        %s246 = sadd.s32 %s244, %s245
        %s247 = smul.addr %s246, 8
        %s248 = scalar_lea.vmem %s1, %s247
        %s249 = smul.u32 2, %s23
        %s250 = smul.u32 2, %s23
        %v252 = vld [vmem:[%s238] sm:$0xf]
        %v253 = vld [vmem:[%s238 + $0x4] sm:$0xf]
        %v254 = vld [vmem:[#allocation2] sm:$0xff]
        %v255 = vld [vmem:[#allocation2 + $0x8] sm:$0xff]
        %v256 = vld [vmem:[#allocation2 + $0x10] sm:$0xff]
        %v257 = vld [vmem:[#allocation2 + $0x18] sm:$0xff]
        %v258 = vld [vmem:[#allocation2 + $0x20] sm:$0xff]
        %v259 = vld [vmem:[#allocation2 + $0x28] sm:$0xff]
        %v260 = vld [vmem:[#allocation2 + $0x30] sm:$0xff]
        %v261 = vld [vmem:[#allocation2 + $0x38] sm:$0xff]
        %v262 = vld [vmem:[#allocation2 + $0x40] sm:$0xff]
        %v263 = vld [vmem:[#allocation2 + $0x48] sm:$0xff]
        %v264 = vld [vmem:[#allocation2 + $0x50] sm:$0xff]
        %v265 = vld [vmem:[#allocation2 + $0x58] sm:$0xff]
        %v268 = vunpack.c.l.b16 %v252
        %v269 = vunpack.c.l.b16 %v253
        %v270 = vpack.c.b16 %v269, %v268
        %v283 = vunpack.c.l.b16 %v254
        %v284 = vunpack.c.h.b16 %v254
        %v285 = vunpack.c.l.b16 %v255
        %v286 = vunpack.c.h.b16 %v255
        %v287 = vunpack.c.l.b16 %v256
        %v288 = vunpack.c.h.b16 %v256
        %v289 = vunpack.c.l.b16 %v257
        %v290 = vunpack.c.h.b16 %v257
        %v291 = vunpack.c.l.b16 %v258
        %v292 = vunpack.c.h.b16 %v258
        %v293 = vunpack.c.l.b16 %v259
        %v294 = vunpack.c.h.b16 %v259
        %v295 = vunpack.c.l.b16 %v260
        %v296 = vunpack.c.h.b16 %v260
        %v297 = vunpack.c.l.b16 %v261
        %v298 = vunpack.c.h.b16 %v261
        %v299 = vunpack.c.l.b16 %v262
        %v300 = vunpack.c.h.b16 %v262
        %v301 = vunpack.c.l.b16 %v263
        %v302 = vunpack.c.h.b16 %v263
        %v303 = vunpack.c.l.b16 %v264
        %v304 = vunpack.c.h.b16 %v264
        %v305 = vunpack.c.l.b16 %v265
        %v306 = vunpack.c.h.b16 %v265
        %v307 = vpack.c.b16 %v289, %v283
        %v308 = vpack.c.b16 %v290, %v284
        %v309 = vpack.c.b16 %v291, %v285
        %v310 = vpack.c.b16 %v292, %v286
        %v311 = vpack.c.b16 %v293, %v287
        %v312 = vpack.c.b16 %v294, %v288
        %v313 = vpack.c.b16 %v301, %v295
        %v314 = vpack.c.b16 %v302, %v296
        %v315 = vpack.c.b16 %v303, %v297
        %v316 = vpack.c.b16 %v304, %v298
        %v317 = vpack.c.b16 %v305, %v299
        %v318 = vpack.c.b16 %v306, %v300
        %vm331 = vcmask 261120
        %v333 = vsel %vm331, %v270, 0
        %335 = vmatprep.subr.bf16.mxu0 %v308
        %336 = vmatpush1.bf16.msra.mxu0 %v307
        %337 = vmatprep.subr.bf16.mxu0 %v314
        %338 = vmatpush1.bf16.msra.mxu0 %v313
        %339 = vmatprep.subr.bf16.mxu0 0
        %340 = vmatpush1.bf16.msra.mxu0 0
        %341 = vmatprep.subr.bf16.mxu0 0
        %342 = vmatpush1.bf16.msra.mxu0 0
        %343 = vmatprep.subr.bf16.mxu0 0
        %344 = vmatpush1.bf16.msra.mxu0 0
        %345 = vmatprep.subr.bf16.mxu0 0
        %346 = vmatpush1.bf16.msra.mxu0 0
        %347 = vmatprep.subr.bf16.mxu0 0
        %348 = vmatpush1.bf16.msra.mxu0 0
        %349 = vmatprep.subr.bf16.mxu0 0
        %350 = vmatpush1.bf16.msra.mxu0 0
        %351 = vmatprep.subr.bf16.mxu0 0
        %352 = vmatpush1.bf16.msra.mxu0 0
        %353 = vmatprep.subr.bf16.mxu0 0
        %354 = vmatpush1.bf16.msra.mxu0 0
        %355 = vmatprep.subr.bf16.mxu0 0
        %356 = vmatpush1.bf16.msra.mxu0 0
        %357 = vmatprep.subr.bf16.mxu0 0
        %358 = vmatpush1.bf16.msra.mxu0 0
        %359 = vmatprep.subr.bf16.mxu0 0
        %360 = vmatpush1.bf16.msra.mxu0 0
        %361 = vmatprep.subr.bf16.mxu0 0
        %362 = vmatpush1.bf16.msra.mxu0 0
        %363 = vmatprep.subr.bf16.mxu0 0
        %364 = vmatpush1.bf16.msra.mxu0 0
        %365 = vmatprep.subr.bf16.mxu0 0
        %366 = vmatpush1.bf16.msra.mxu0 0
        %367 = vmatprep.mubr.bf16.mxu0 0
        %368 = vmatmul.mubr.bf16.gmra.mrb[0].mxu0 %v333
        %v369 = vpop.f32.mrb[0].mxu0
        %v370 = vadd.f32 0.0, %v369
        %v371 = vpop.f32.mrb[0].mxu0
        %v372 = vadd.f32 0.0, %v371
        %v373 = vpop.f32.mrb[0].mxu0
        %v374 = vadd.f32 0.0, %v373
        %v375 = vpop.f32.mrb[0].mxu0
        %v376 = vadd.f32 0.0, %v375
        %377 = vdwg.mxu0
        %378 = vmatprep.subr.bf16.mxu0 %v310
        %379 = vmatpush1.bf16.msra.mxu0 %v309
        %380 = vmatprep.subr.bf16.mxu0 %v316
        %381 = vmatpush1.bf16.msra.mxu0 %v315
        %382 = vmatprep.subr.bf16.mxu0 0
        %383 = vmatpush1.bf16.msra.mxu0 0
        %384 = vmatprep.subr.bf16.mxu0 0
        %385 = vmatpush1.bf16.msra.mxu0 0
        %386 = vmatprep.subr.bf16.mxu0 0
        %387 = vmatpush1.bf16.msra.mxu0 0
        %388 = vmatprep.subr.bf16.mxu0 0
        %389 = vmatpush1.bf16.msra.mxu0 0
        %390 = vmatprep.subr.bf16.mxu0 0
        %391 = vmatpush1.bf16.msra.mxu0 0
        %392 = vmatprep.subr.bf16.mxu0 0
        %393 = vmatpush1.bf16.msra.mxu0 0
        %394 = vmatprep.subr.bf16.mxu0 0
        %395 = vmatpush1.bf16.msra.mxu0 0
        %396 = vmatprep.subr.bf16.mxu0 0
        %397 = vmatpush1.bf16.msra.mxu0 0
        %398 = vmatprep.subr.bf16.mxu0 0
        %399 = vmatpush1.bf16.msra.mxu0 0
        %400 = vmatprep.subr.bf16.mxu0 0
        %401 = vmatpush1.bf16.msra.mxu0 0
        %402 = vmatprep.subr.bf16.mxu0 0
        %403 = vmatpush1.bf16.msra.mxu0 0
        %404 = vmatprep.subr.bf16.mxu0 0
        %405 = vmatpush1.bf16.msra.mxu0 0
        %406 = vmatprep.subr.bf16.mxu0 0
        %407 = vmatpush1.bf16.msra.mxu0 0
        %408 = vmatprep.subr.bf16.mxu0 0
        %409 = vmatpush1.bf16.msra.mxu0 0
        %410 = vmatprep.mubr.bf16.mxu0 0
        %411 = vmatmul.mubr.bf16.gmra.mrb[0].mxu0 %v333
        %v412 = vpop.f32.mrb[0].mxu0
        %v413 = vadd.f32 0.0, %v412
        %v414 = vpop.f32.mrb[0].mxu0
        %v415 = vadd.f32 0.0, %v414
        %v416 = vpop.f32.mrb[0].mxu0
        %v417 = vadd.f32 0.0, %v416
        %v418 = vpop.f32.mrb[0].mxu0
        %v419 = vadd.f32 0.0, %v418
        %420 = vdwg.mxu0
        %421 = vmatprep.subr.bf16.mxu0 %v312
        %422 = vmatpush1.bf16.msra.mxu0 %v311
        %423 = vmatprep.subr.bf16.mxu0 %v318
        %424 = vmatpush1.bf16.msra.mxu0 %v317
        %425 = vmatprep.subr.bf16.mxu0 0
        %426 = vmatpush1.bf16.msra.mxu0 0
        %427 = vmatprep.subr.bf16.mxu0 0
        %428 = vmatpush1.bf16.msra.mxu0 0
        %429 = vmatprep.subr.bf16.mxu0 0
        %430 = vmatpush1.bf16.msra.mxu0 0
        %431 = vmatprep.subr.bf16.mxu0 0
        %432 = vmatpush1.bf16.msra.mxu0 0
        %433 = vmatprep.subr.bf16.mxu0 0
        %434 = vmatpush1.bf16.msra.mxu0 0
        %435 = vmatprep.subr.bf16.mxu0 0
        %436 = vmatpush1.bf16.msra.mxu0 0
        %437 = vmatprep.subr.bf16.mxu0 0
        %438 = vmatpush1.bf16.msra.mxu0 0
        %439 = vmatprep.subr.bf16.mxu0 0
        %440 = vmatpush1.bf16.msra.mxu0 0
        %441 = vmatprep.subr.bf16.mxu0 0
        %442 = vmatpush1.bf16.msra.mxu0 0
        %443 = vmatprep.subr.bf16.mxu0 0
        %444 = vmatpush1.bf16.msra.mxu0 0
        %445 = vmatprep.subr.bf16.mxu0 0
        %446 = vmatpush1.bf16.msra.mxu0 0
        %447 = vmatprep.subr.bf16.mxu0 0
        %448 = vmatpush1.bf16.msra.mxu0 0
        %449 = vmatprep.subr.bf16.mxu0 0
        %450 = vmatpush1.bf16.msra.mxu0 0
        %451 = vmatprep.subr.bf16.mxu0 0
        %452 = vmatpush1.bf16.msra.mxu0 0
        %453 = vmatprep.mubr.bf16.mxu0 0
        %454 = vmatmul.mubr.bf16.gmra.mrb[0].mxu0 %v333
        %v455 = vpop.f32.mrb[0].mxu0
        %v456 = vadd.f32 0.0, %v455
        %v457 = vpop.f32.mrb[0].mxu0
        %v458 = vadd.f32 0.0, %v457
        %v459 = vpop.f32.mrb[0].mxu0
        %v460 = vadd.f32 0.0, %v459
        %v461 = vpop.f32.mrb[0].mxu0
        %v462 = vadd.f32 0.0, %v461
        %463 = vdwg.mxu0
        %v464 = vld [vmem:[%s248] sm:$0xff]
        %v465 = vld [vmem:[%s248 + $0x8] sm:$0xff]
        %467 = vset.pattern.permute.xlu0 0
        %468 = vperm.xlu0 %467, %v464
        %v469 = vpop.permute.xlu0 %468
        %472 = vset.pattern.permute.xlu0 0
        %473 = vperm.xlu0 %472, %v465
        %v474 = vpop.permute.xlu0 %473
        %v476 = vmul.f32 %v370, %v469
        %v477 = vmul.f32 %v374, %v474
        %v478 = vadd.f32 %v458, %v476
        %v479 = vadd.f32 %v462, %v477
        %480 = vset.pattern.permute.xlu0 1
        %481 = vperm.xlu0 %480, %v464
        %v482 = vpop.permute.xlu0 %481
        %484 = vset.pattern.permute.xlu0 1
        %485 = vperm.xlu0 %484, %v465
        %v486 = vpop.permute.xlu0 %485
        %v488 = vmul.f32 %v372, %v482
        %v489 = vmul.f32 %v376, %v486
        %v490 = vadd.f32 %v478, %v488
        %v491 = vadd.f32 %v479, %v489
        %492 = vset.pattern.permute.xlu0 2
        %493 = vperm.xlu0 %492, %v464
        %v494 = vpop.permute.xlu0 %493
        %496 = vset.pattern.permute.xlu0 2
        %497 = vperm.xlu0 %496, %v465
        %v498 = vpop.permute.xlu0 %497
        %v500 = vmul.f32 %v413, %v494
        %v501 = vmul.f32 %v417, %v498
        %v502 = vadd.f32 %v490, %v500
        %v503 = vadd.f32 %v491, %v501
        %504 = vset.pattern.permute.xlu0 3
        %505 = vperm.xlu0 %504, %v464
        %v506 = vpop.permute.xlu0 %505
        %508 = vset.pattern.permute.xlu0 3
        %509 = vperm.xlu0 %508, %v465
        %v510 = vpop.permute.xlu0 %509
        %v512 = vmul.f32 %v415, %v506
        %v513 = vmul.f32 %v419, %v510
        %v514 = vadd.f32 %v502, %v512
        %v515 = vadd.f32 %v503, %v513
        %516 = vset.pattern.permute.xlu0 4
        %517 = vperm.xlu0 %516, %v464
        %v518 = vpop.permute.xlu0 %517
        %520 = vset.pattern.permute.xlu0 4
        %521 = vperm.xlu0 %520, %v465
        %v522 = vpop.permute.xlu0 %521
        %v524 = vmul.f32 %v456, %v518
        %v525 = vmul.f32 %v460, %v522
        %v526 = vadd.f32 %v514, %v524
        %v527 = vadd.f32 %v515, %v525
        %528 = vst [vmem:[%s229] sm:$0xff] %v526
        %529 = vst [vmem:[%s229 + $0x8] sm:$0xff] %v527
        %s530 = sand.u32 %s117, 1
        %s531 = scalar_lea.sflag [#allocation4], %s530
        %s532 = sand.u32 %s117, 1
        %s533 = smul.addr %s532, 16
        %s534 = scalar_lea.vmem [#allocation5], %s533
        // Predicated region
        $region37: #{tpu_custom_call.1} parent=31 // pred_check
          %p535 = pneg %p127
        $region38: #{tpu_custom_call.1} parent=31 // pred_check_branch
          %537 = sbr.rel (%p535) target = $region40
        $region39: #{tpu_custom_call.1} parent=31 // pred_region
          %s538 = smul.u32 2, %s23
          %s540 = ssub.s32 256, 256
          %541 = vsyncadd %s531, %s540
          %s542 = smul.addr %s22, 2
          %s543 = sadd.s32 %s538, %s542
          %s544 = smul.addr %s543, 128
          %s545 = scalar_lea.hbm %s3, %s544
          %s546 = sshll.u32 %s534, 4
          %s547 = int_to_ptr.vmem [resolvable:$true] %s546
          %552 = dma.vmem_to_hbm [thread:$0]  %s547, 256, %s545, %s531, 128, 128, 8
        $region40: #{tpu_custom_call.1} parent=31 // pred_fallthru
          _
      $region32: #{tpu_custom_call.1} parent=5 // pred_fallthru
        _
      %p553 = scmp.le.s32.totalorder 2, %s13
      // Predicated region
      $region41: #{tpu_custom_call.1} parent=5 // pred_check
        %p554 = pneg %p553
      $region42: #{tpu_custom_call.1} parent=5 // pred_check_branch
        %556 = sbr.rel (%p554) target = $region44
      $region43: #{tpu_custom_call.1} parent=5 // pred_region
        %s557 = ssub.s32 %s13, 2
        // Predicated region
        $region45: #{tpu_custom_call.1} parent=43 // pred_check
          %p558 = pneg %p133
        $region46: #{tpu_custom_call.1} parent=43 // pred_check_branch
          %560 = sbr.rel (%p558) target = $region48
        $region47: #{tpu_custom_call.1} parent=43 // pred_region
          %s561 = sand.u32 %s118, 1
          %s562 = scalar_lea.sflag [#allocation4], %s561
          %s563 = sand.u32 %s118, 1
          %s564 = smul.addr %s563, 16
          %s565 = scalar_lea.vmem [#allocation5], %s564
          %566 = dma.done %s562, 256
        $region48: #{tpu_custom_call.1} parent=43 // pred_fallthru
          _
      $region44: #{tpu_custom_call.1} parent=5 // pred_fallthru
        _
    $region6: #{tpu_custom_call.1} parent=1 // loop_footer
      %s17 = sadd.s32 1, %s13
    $region7: #{tpu_custom_call.1} parent=1 // loop_footer_branch
      %12 = sbr.rel target = $region3
    $region8: #{tpu_custom_call.1} parent=1 // loop_exit
      _
    %567 = vsyncpa [#allocation3], 1
    %s568 = scalar_lea.sflag [#allocation3], 1
    %569 = vsyncpa %s568, 1
    %570 = vsyncpa [#allocation4], 1
    %s571 = scalar_lea.sflag [#allocation4], 1
    %572 = vsyncpa %s571, 1

</llo_original>
